<compile_context>
chip_gen: v6e
topology: v6e:2x2x1
jax: 0.10.0
libtpu: 0.0.40
codegen_flags: <defaults>
</compile_context>

<pallas_src>
import jax
import jax.numpy as jnp
from jax.experimental import pallas as pl
from jax.experimental.pallas import tpu as pltpu

# ---- model hyperparameters (mirroring the PyTorch script) -------------------
sentences = ['我 喜欢 玩具', '我 爱 爸爸', '我 讨厌 挨打']
word_list = sorted(set(' '.join(sentences).split()))   # sorted -> deterministic
voc_size = len(word_list)                               # 7
embedding_size = 2
n_hidden = 2
n_step = 2

# ---- layout constants --------------------------------------------------------
LANES = 128                          # vreg lane width
SUBLANES = 8                         # f32 sublane count
K_ONEHOT = n_step * voc_size         # 14 packed one-hot positions (step s offset by s*voc)
BIAS_LANE = K_ONEHOT                 # lane 14: always-on lane carrying the linear1 bias

# Packed parameter buffer: one aligned (8, 128) f32 tile, all reads are whole rows.
ROW_E = 0                            # rows 0..n_hidden-1 : fused embed+linear1 weights (+bias lane)
ROW_B2 = ROW_E + n_hidden            # row 2              : linear2 bias (first voc_size lanes)
ROW_W2 = ROW_B2 + 1                  # rows 3..3+n_hidden-1: linear2 weight rows (first voc_size lanes)
PARAM_ROWS = SUBLANES                # 8 rows total (rows 5..7 zero)


def prepare_params(C, W1, b1, W2, b2):
    """Host-side, done ONCE: fold the embedding into linear1 and pack all parameters
    into a single lane-dense (8, 128) f32 tile.

    C:  (voc_size, emb)          torch nn.Embedding weight
    W1: (n_hidden, n_step*emb)   torch nn.Linear weight (out, in)
    b1: (n_hidden,)
    W2: (voc_size, n_hidden)     torch nn.Linear weight (out, in)
    b2: (voc_size,)
    """
    C = C.astype(jnp.float32)
    W1T = W1.T.astype(jnp.float32)                       # (n_step*emb, n_hidden)
    # E_packed[s*voc + w, h] = C[w] @ W1.T[s*emb:(s+1)*emb, h]
    E_packed = jnp.concatenate(
        [C @ W1T[s * embedding_size:(s + 1) * embedding_size, :] for s in range(n_step)],
        axis=0,
    )                                                     # (K_ONEHOT, n_hidden)
    W2T = W2.T.astype(jnp.float32)                        # (n_hidden, voc_size)

    P = jnp.zeros((PARAM_ROWS, LANES), jnp.float32)
    for h in range(n_hidden):
        P = P.at[ROW_E + h, 0:K_ONEHOT].set(E_packed[:, h])
        P = P.at[ROW_E + h, BIAS_LANE].set(b1[h].astype(jnp.float32))   # bias lane
        P = P.at[ROW_W2 + h, 0:voc_size].set(W2T[h, :])
    P = P.at[ROW_B2, 0:voc_size].set(b2.astype(jnp.float32))
    # NOTE: lanes >= voc_size of the b2 / W2 rows MUST stay zero so padded output
    # lanes remain exactly zero; rows 5..7 are pure padding.
    return P


# ---- Pallas kernel (pure VPU / XLU / EUP; no MXU) ----------------------------
def nplm_kernel(idxb_ref, p_ref, out_ref):
    """idxb_ref: (n_step, BB, 128) int32 — shifted word index of step s, lane-broadcast
                 (padded batch rows hold -1, which never matches the lane iota).
       p_ref:    (8, 128) f32 packed parameters (see prepare_params).
       out_ref:  (BB, 128) f32 lane-dense output (first voc_size lanes are the logits).
    """
    bb = out_ref.shape[0]
    lane = jax.lax.broadcasted_iota(jnp.int32, (bb, LANES), 1)

    # Packed one-hot over 128 lanes: step-s hit at lane idx[b,s] + s*voc, plus the
    # always-on bias lane.  Pure elementwise compares — no lane shuffles.
    hit = lane == BIAS_LANE
    for s in range(n_step):
        hit = jnp.logical_or(hit, idxb_ref[s] == lane)
    onehot = hit.astype(jnp.float32)                      # (BB, 128)

    # linear2 bias as the accumulator seed (whole lane-dense row read from the ref).
    out = p_ref[ROW_B2:ROW_B2 + 1, :]                     # (1, 128)

    for h in range(n_hidden):
        e_row = p_ref[ROW_E + h:ROW_E + h + 1, :]         # (1, 128) embed+lin1 weights + bias lane
        # fused embedding + linear1 (+ b1) + tanh: VPU mul, XLU lane-reduce, EUP tanh
        hid = jnp.tanh(jnp.sum(onehot * e_row, axis=-1, keepdims=True))   # (BB, 1)
        w_row = p_ref[ROW_W2 + h:ROW_W2 + h + 1, :]       # (1, 128) linear2 weights
        out = out + hid * w_row                           # (BB, 128)

    out_ref[...] = out                                    # unmasked lane-dense store


def _pick_block_b(b_pad):
    """Largest batch block (multiple of 8, <=256) that divides the padded batch."""
    for cand in (256, 128, 64, 32, 16, 8):
        if b_pad % cand == 0:
            return cand
    return SUBLANES


@jax.jit
def nplm_forward(idx, packed_params):
    """idx: (B, n_step) integer word indices.  packed_params: output of prepare_params."""
    B = idx.shape[0]
    B_pad = ((B + SUBLANES - 1) // SUBLANES) * SUBLANES   # keep every vreg op unmasked
    block_b = _pick_block_b(B_pad)

    # Shift per-step indices into the packed one-hot coordinate system and
    # lane-broadcast them host-side (same jit) -> no masked loads / lane
    # broadcasts of idx inside the kernel.  Padded batch rows use -1 (never hits).
    shifted = idx.astype(jnp.int32) + (jnp.arange(n_step, dtype=jnp.int32) * voc_size)[None, :]
    shifted = jnp.pad(shifted, ((0, B_pad - B), (0, 0)), constant_values=-1)
    idx_b = jnp.broadcast_to(shifted.T[:, :, None], (n_step, B_pad, LANES))

    out_padded = pl.pallas_call(
        nplm_kernel,
        out_shape=jax.ShapeDtypeStruct((B_pad, LANES), jnp.float32),
        grid=(B_pad // block_b,),
        in_specs=[
            pl.BlockSpec((n_step, block_b, LANES), lambda i: (0, i, 0)),
            pl.BlockSpec((PARAM_ROWS, LANES), lambda i: (0, 0)),
        ],
        out_specs=pl.BlockSpec((block_b, LANES), lambda i: (i, 0)),
        compiler_params=pltpu.CompilerParams(dimension_semantics=("parallel",)),
    )(idx_b, packed_params)
    return out_padded[:B, :voc_size]                      # (B, voc_size), same jit region


def nplm_reference(idx, C, W1, b1, W2, b2):
    """Pure-JAX reference matching the PyTorch forward semantics."""
    x = jnp.take(C, idx, axis=0)                          # (B, n_step, emb)
    x = x.reshape(idx.shape[0], n_step * embedding_size)  # (B, n_step*emb)
    hidden = jnp.tanh(x @ W1.T + b1)
    return hidden @ W2.T + b2


if __name__ == "__main__":
    key = jax.random.PRNGKey(0)
    k_idx, k_emb, k_w1, k_b1, k_w2, k_b2 = jax.random.split(key, 6)

    batch = 8
    # input word indices, shape (batch, n_step); in-range per PyTorch Embedding contract.
    idx = jax.random.randint(k_idx, (batch, n_step), 0, voc_size, dtype=jnp.int32)

    # Deterministic parameter init mimicking torch defaults:
    #   nn.Embedding -> N(0, 1);  nn.Linear -> U(-1/sqrt(in), 1/sqrt(in))
    C = jax.random.normal(k_emb, (voc_size, embedding_size), dtype=jnp.float32)
    in1 = n_step * embedding_size
    W1 = jax.random.uniform(k_w1, (n_hidden, in1), minval=-1.0, maxval=1.0) / jnp.sqrt(in1)
    b1 = jax.random.uniform(k_b1, (n_hidden,), minval=-1.0, maxval=1.0) / jnp.sqrt(in1)
    W2 = jax.random.uniform(k_w2, (voc_size, n_hidden), minval=-1.0, maxval=1.0) / jnp.sqrt(n_hidden)
    b2 = jax.random.uniform(k_b2, (voc_size,), minval=-1.0, maxval=1.0) / jnp.sqrt(n_hidden)

    # One-time parameter packing (hoisted out of the per-call path).
    packed = jax.block_until_ready(prepare_params(C, W1, b1, W2, b2))

    out = jax.block_until_ready(nplm_forward(idx, packed))

    ref = nplm_reference(idx, C, W1, b1, W2, b2)
    assert out.shape == (batch, voc_size), out.shape
    assert jnp.allclose(out, ref, atol=1e-5, rtol=1e-5), (out, ref)

    # TODO(synk): the epoch-gated debug prints of the PyTorch forward are host-side
    # side effects with no Pallas equivalent and are intentionally omitted.
    # TODO(synk): out-of-range word indices silently contribute nothing (PyTorch's
    # Embedding would raise); in-range behavior is identical.
    print("KERNEL_OK")
</pallas_src>

<mosaic_0001>
module attributes {stable_mosaic.version = 11 : i64} {
  func.func @nplm_kernel(%arg0: i32, %arg1: memref<2x8x128xi32, #tpu.memory_space<vmem>>, %arg2: memref<8x128xf32, #tpu.memory_space<vmem>>, %arg3: memref<8x128xf32, #tpu.memory_space<vmem>>) attributes {dimension_semantics = [#tpu.dimension_semantics<parallel>], iteration_bounds = array<i64: 1>, scalar_prefetch = 0 : i64, scratch_operands = 0 : i64, tpu.core_type = #tpu.core_type<tc>, window_params = [{transform_indices = @transform_0, window_bounds = array<i64: 2, 8, 128>}, {pipeline_mode = #tpu.pipeline_mode<synchronous>, transform_indices = @transform_1, window_bounds = array<i64: 8, 128>}, {transform_indices = @transform_2, window_bounds = array<i64: 8, 128>}]} {
    %0 = tpu.iota {dimensions = array<i32: 1>} : vector<8x128xi32>
    %c14_i32 = arith.constant 14 : i32
    %1 = vector.broadcast %c14_i32 : i32 to vector<8x128xi32>
    %2 = arith.cmpi eq, %0, %1 : vector<8x128xi32>
    %c0 = arith.constant 0 : index
    %c0_0 = arith.constant 0 : index
    %c0_1 = arith.constant 0 : index
    %3 = vector.load %arg1[%c0, %c0_0, %c0_1] : memref<2x8x128xi32, #tpu.memory_space<vmem>>, vector<1x8x128xi32>
    %4 = vector.shape_cast %3 : vector<1x8x128xi32> to vector<8x128xi32>
    %5 = arith.cmpi eq, %4, %0 : vector<8x128xi32>
    %6 = arith.ori %2, %5 : vector<8x128xi1>
    %c1 = arith.constant 1 : index
    %c0_2 = arith.constant 0 : index
    %c0_3 = arith.constant 0 : index
    %7 = vector.load %arg1[%c1, %c0_2, %c0_3] : memref<2x8x128xi32, #tpu.memory_space<vmem>>, vector<1x8x128xi32>
    %8 = vector.shape_cast %7 : vector<1x8x128xi32> to vector<8x128xi32>
    %9 = arith.cmpi eq, %8, %0 : vector<8x128xi32>
    %10 = arith.ori %6, %9 : vector<8x128xi1>
    %11 = arith.extui %10 : vector<8x128xi1> to vector<8x128xi32>
    %12 = arith.sitofp %11 : vector<8x128xi32> to vector<8x128xf32>
    %c2 = arith.constant 2 : index
    %c0_4 = arith.constant 0 : index
    %13 = vector.load %arg2[%c2, %c0_4] : memref<8x128xf32, #tpu.memory_space<vmem>>, vector<1x128xf32>
    %c0_5 = arith.constant 0 : index
    %c0_6 = arith.constant 0 : index
    %14 = vector.load %arg2[%c0_5, %c0_6] : memref<8x128xf32, #tpu.memory_space<vmem>>, vector<1x128xf32>
    %15 = vector.broadcast %14 : vector<1x128xf32> to vector<8x128xf32>
    %16 = arith.mulf %12, %15 : vector<8x128xf32>
    %cst = arith.constant dense<0.000000e+00> : vector<8xf32>
    %17 = vector.multi_reduction <add>, %16, %cst [1] : vector<8x128xf32> to vector<8xf32>
    %18 = vector.shape_cast %17 : vector<8xf32> to vector<8x1xf32>
    %19 = math.tanh %18 : vector<8x1xf32>
    %c3 = arith.constant 3 : index
    %c0_7 = arith.constant 0 : index
    %20 = vector.load %arg2[%c3, %c0_7] : memref<8x128xf32, #tpu.memory_space<vmem>>, vector<1x128xf32>
    %21 = vector.broadcast %19 : vector<8x1xf32> to vector<8x128xf32>
    %22 = vector.broadcast %20 : vector<1x128xf32> to vector<8x128xf32>
    %23 = arith.mulf %21, %22 : vector<8x128xf32>
    %24 = vector.broadcast %13 : vector<1x128xf32> to vector<8x128xf32>
    %25 = arith.addf %24, %23 : vector<8x128xf32>
    %c1_8 = arith.constant 1 : index
    %c0_9 = arith.constant 0 : index
    %26 = vector.load %arg2[%c1_8, %c0_9] : memref<8x128xf32, #tpu.memory_space<vmem>>, vector<1x128xf32>
    %27 = vector.broadcast %26 : vector<1x128xf32> to vector<8x128xf32>
    %28 = arith.mulf %12, %27 : vector<8x128xf32>
    %cst_10 = arith.constant dense<0.000000e+00> : vector<8xf32>
    %29 = vector.multi_reduction <add>, %28, %cst_10 [1] : vector<8x128xf32> to vector<8xf32>
    %30 = vector.shape_cast %29 : vector<8xf32> to vector<8x1xf32>
    %31 = math.tanh %30 : vector<8x1xf32>
    %c4 = arith.constant 4 : index
    %c0_11 = arith.constant 0 : index
    %32 = vector.load %arg2[%c4, %c0_11] : memref<8x128xf32, #tpu.memory_space<vmem>>, vector<1x128xf32>
    %33 = vector.broadcast %31 : vector<8x1xf32> to vector<8x128xf32>
    %34 = vector.broadcast %32 : vector<1x128xf32> to vector<8x128xf32>
    %35 = arith.mulf %33, %34 : vector<8x128xf32>
    %36 = arith.addf %25, %35 : vector<8x128xf32>
    %c0_12 = arith.constant 0 : index
    %c0_13 = arith.constant 0 : index
    %37 = vector.load %arg3[%c0_12, %c0_13] : memref<8x128xf32, #tpu.memory_space<vmem>>, vector<8x128xf32>
    tpu.vector_store %arg3[%c0_12, %c0_13], %36 {strides = array<i32>} : memref<8x128xf32, #tpu.memory_space<vmem>>, vector<8x128xf32>,
    return
  }
  func.func @transform_0(%arg0: i32) -> (i32, i32, i32) {
    %c0_i32 = arith.constant 0 : i32
    %c0_i32_0 = arith.constant 0 : i32
    %c0_i32_1 = arith.constant 0 : i32
    return %c0_i32, %arg0, %c0_i32_0 : i32, i32, i32
  }
  func.func @transform_1(%arg0: i32) -> (i32, i32) {
    %c0_i32 = arith.constant 0 : i32
    %c0_i32_0 = arith.constant 0 : i32
    %c0_i32_1 = arith.constant 0 : i32
    return %c0_i32, %c0_i32_0 : i32, i32
  }
  func.func @transform_2(%arg0: i32) -> (i32, i32) {
    %c0_i32 = arith.constant 0 : i32
    %c0_i32_0 = arith.constant 0 : i32
    return %arg0, %c0_i32 : i32, i32
  }
}

</mosaic_0001>

<llo_original>
// kernel: nplm_forward.1
$region0: #{nplm_forward.1}
  #allocation0 [shape = 'u32[]', space=smem, size = 0x4, offset = 0x4, fixed_abs, tag = 'smem constant byte address 0x4 - core index']
  #allocation1 [shape = 'u32[144,128]{1,0:T(1,128)}', space=vmem, size = 0x12000, scoped, tag = 'internal scratch']
  %s0 = inlined_call_operand.vmem [shape: s32[2,8,128], index: 0, kind: input, shape index: {}]
  %s1 = inlined_call_operand.vmem [shape: f32[8,128], index: 1, kind: input, shape index: {}]
  %s2 = inlined_call_operand.hbm [shape: f32[8,128], index: 2, kind: output, shape index: {}]
  %s3 = sld [smem:[#allocation0]]
  $region18: #{nplm_forward.1} parent=0
    _
  %s5 = ssub.s32 1, %s3
  %s6 = scalar_select 0, %s5, %s3
  $region1: #{nplm_forward.1} parent=0
    #allocation2 [shape = 'u8[4096]{0}', space=vmem, size = 0x1000, scoped, tag = 'output window, operand 0, single buffered']
    #allocation3 [shape = 's32[1]{0}', space=sflag, size = 0x4, scoped, tag = 'scoped memory for nplm_forward.1']
    %7 = vsyncpa [#allocation3], 0
    // Predicated region
    $region2: #{nplm_forward.1} parent=1 // pred_check
      _
    $region3: #{nplm_forward.1} parent=1 // pred_check_branch
      %9 = sbr.rel (0) target = $region5
    $region4: #{nplm_forward.1} parent=1 // pred_region
      _
    $region5: #{nplm_forward.1} parent=1 // pred_fallthru
      _
    // Predicated region
    $region6: #{nplm_forward.1} parent=1 // pred_check
      _
    $region7: #{nplm_forward.1} parent=1 // pred_check_branch
      %11 = sbr.rel (0) target = $region9
    $region8: #{nplm_forward.1} parent=1 // pred_region
      _
    $region9: #{nplm_forward.1} parent=1 // pred_fallthru
      _
    %v12 = vlaneseq
    %v13 = vand.u32 %v12, 127
    %vm14 = vcmp.eq.s32.totalorder %v13, 14
    %v15 = vld [vmem:[%s0] sm:$0xff]
    %vm16 = vcmp.eq.s32.totalorder %v15, %v13
    %vm17 = vmor %vm14, %vm16
    %s18 = scalar_lea.vmem %s0, 8
    %v19 = vld [vmem:[%s18] sm:$0xff]
    %vm20 = vcmp.eq.s32.totalorder %v19, %v13
    %vm21 = vmor %vm17, %vm20
    %v22 = vsel %vm21, 1, 0
    %v23 = vcvt.s32.f32 %v22
    %v24 = vld [vmem:[%s1 + $0x2] sm:$0x1]
    %v25 = vld [vmem:[%s1] sm:$0x1]
    %v26 = vlaneseq
    %v27 = vshrl.u32 %v26, 7
    %v28 = vsub.s32 0, %v27
    %v29 = vrot.slane %v25, %v28
    %v30 = vmul.f32 %v23, %v29
    %31 = vadd.xlane.f32.xlu0 %v30
    %v32 = vpop.xlane.xlu0 %31
    %v33 = vtanh.pop %v32
    %v34 = vld [vmem:[%s1 + $0x3] sm:$0x1]
    %v35 = vlaneseq
    %v36 = vshrl.u32 %v35, 7
    %v37 = vsub.s32 0, %v36
    %v38 = vrot.slane %v34, %v37
    %v39 = vmul.f32 %v33, %v38
    %v40 = vlaneseq
    %v41 = vshrl.u32 %v40, 7
    %v42 = vsub.s32 0, %v41
    %v43 = vrot.slane %v24, %v42
    %v44 = vadd.f32 %v43, %v39
    %v45 = vld [vmem:[%s1 + $0x1] sm:$0x1]
    %v46 = vlaneseq
    %v47 = vshrl.u32 %v46, 7
    %v48 = vsub.s32 0, %v47
    %v49 = vrot.slane %v45, %v48
    %v50 = vmul.f32 %v23, %v49
    %51 = vadd.xlane.f32.xlu0 %v50
    %v52 = vpop.xlane.xlu0 %51
    %v53 = vtanh.pop %v52
    %v54 = vld [vmem:[%s1 + $0x4] sm:$0x1]
    %v55 = vlaneseq
    %v56 = vshrl.u32 %v55, 7
    %v57 = vsub.s32 0, %v56
    %v58 = vrot.slane %v54, %v57
    %v59 = vmul.f32 %v53, %v58
    %v60 = vadd.f32 %v44, %v59
    %61 = vst [vmem:[#allocation2] sm:$0xff] %v60
    // Predicated region
    $region10: #{nplm_forward.1} parent=1 // pred_check
      _
    $region11: #{nplm_forward.1} parent=1 // pred_check_branch
      %63 = sbr.rel (0) target = $region13
    $region12: #{nplm_forward.1} parent=1 // pred_region
      %s65 = ssub.s32 128, 128
      %66 = vsyncadd [#allocation3], %s65
      %s68 = sshll.u32 [#allocation2], 4
      %s69 = int_to_ptr.vmem [resolvable:$true] %s68
      %71 = dma.vmem_to_hbm [thread:$0]  %s69, 128, %s2, [#allocation3]
    $region13: #{nplm_forward.1} parent=1 // pred_fallthru
      _
    // Predicated region
    $region14: #{nplm_forward.1} parent=1 // pred_check
      _
    $region15: #{nplm_forward.1} parent=1 // pred_check_branch
      %73 = sbr.rel (0) target = $region17
    $region16: #{nplm_forward.1} parent=1 // pred_region
      %74 = dma.done [#allocation3], 128
    $region17: #{nplm_forward.1} parent=1 // pred_fallthru
      _
    %75 = vsyncpa [#allocation3], 1

</llo_original>
